<compile_context>
chip_gen: v5e
topology: v5e:2x2
jax: 0.10.0
libtpu: 0.0.40
codegen_flags: <defaults>
</compile_context>

<pallas_src>
import functools

import jax
import jax.numpy as jnp
from jax import lax
from jax.experimental import pallas as pl
from jax.experimental.pallas import tpu as pltpu

_LANE = 128


def _inconv_kernel(x_ref, w_ref, b_ref, o_ref, *, without_activation):
    # x_ref: (nB, H+2, Lp)  bf16 zero-padded, lane-packed activation rows
    # w_ref: (3*Lp, Mp)     bf16 fused width-Toeplitz weight (resident)
    # b_ref: (1, Mp)        f32 bias tiled across W (resident)
    # o_ref: (nB, H, Mp)    f32 lane-dense output rows
    nB = x_ref.shape[0]
    H = o_ref.shape[1]

    w = w_ref[...]                      # resident weight, loaded once per step
    b = b_ref[...]                      # (1, Mp) f32, broadcasts over rows

    for bi in range(nB):                # small static unroll over batch fold
        xp = x_ref[bi]                  # (H+2, Lp)
        # dy = 0/1/2 taps are row-shifted views of the zero-padded slab; the
        # lane concat is vreg-aligned because Lp is a multiple of 128.
        x_cat = jnp.concatenate([xp[0:H], xp[1:H + 1], xp[2:H + 2]], axis=-1)
        # Single fused MXU matmul, K = 3*Lp, f32 accumulation.
        acc = jnp.dot(x_cat, w, preferred_element_type=jnp.float32)
        acc = acc + b
        if not without_activation:
            acc = jax.nn.sigmoid(acc)   # EUP, f32 (v5e-safe)
        o_ref[bi, :, :] = acc.astype(o_ref.dtype)


def _build_toeplitz_weight(weight, W):
    """(Cout, Cin, 3, 3) OIHW -> (3, W*Cin, W*Cout) width-Toeplitz slabs.

    T[dy, wi*Cin+ci, w*Cout+co] = weight[co, ci, dy, wi-w+1] if 0 <= wi-w+1 < 3
    else 0, so X_dy @ T[dy] performs the dx sweep and the width zero-padding of
    a 3x3, padding=1 conv in one matmul.
    """
    Cout, Cin, KH, KW = weight.shape
    w_hwio = jnp.transpose(weight, (2, 3, 1, 0))            # (3, 3, Cin, Cout)
    wi = jnp.arange(W)[:, None]                             # input column
    wo = jnp.arange(W)[None, :]                             # output column
    dx = wi - wo + 1                                        # (W, W)
    valid = (dx >= 0) & (dx < KW)
    dxc = jnp.clip(dx, 0, KW - 1)
    taps = w_hwio[:, dxc]                                   # (3, W, W, Cin, Cout)
    taps = jnp.where(valid[None, :, :, None, None], taps, 0.0)
    taps = jnp.transpose(taps, (0, 1, 3, 2, 4))             # (3, Win, Cin, Wout, Cout)
    return taps.reshape(KH, W * Cin, W * Cout)


def _choose_batch_block(N, H, Lp, Mp, w_bytes, in_itemsize):
    """Largest divisor of N whose block fits a conservative 12 MiB VMEM budget."""
    budget = 12 * 1024 * 1024
    per_img = (2 * (H + 2) * Lp * in_itemsize   # input block, double-buffered
               + 2 * H * Mp * 4                 # f32 output block, double-buffered
               + H * 3 * Lp * in_itemsize       # x_cat temporary
               + H * Mp * 4)                    # f32 accumulator temporary
    avail = budget - 2 * w_bytes - 2 * Mp * 4   # resident weight + bias (2x buffers)
    if avail < per_img:
        # TODO(synk): H-tiled path for images that exceed the VMEM budget.
        raise ValueError(
            "single-image block does not fit the conservative VMEM budget; "
            "this formulation targets the small-W / small-channel input-layer regime."
        )
    cap = min(N, avail // per_img)
    if N >= 2:
        cap = min(cap, N // 2)   # keep >=2 grid steps so v7x can use both TensorCores
    cap = max(1, int(cap))
    nB = 1
    for d in range(1, cap + 1):
        if N % d == 0:
            nB = d
    return nB


def inconv_forward(x_nchw, weight, bias, *, without_activation=False,
                   mxu_dtype=jnp.bfloat16, batch_block=None):
    """Pallas equivalent of InConv.forward.

    x_nchw: (N, Cin, H, W) f32, weight: (Cout, Cin, 3, 3), bias: (Cout,)
    returns (N, Cout, H, W) matching nn.Conv2d(3x3, padding=1) [+ Sigmoid].
    """
    N, Cin, H, W = x_nchw.shape
    Cout, Cin_w, KH, KW = weight.shape
    assert Cin_w == Cin and (KH, KW) == (3, 3), "InConv is a 3x3, padding=1 conv"

    L = W * Cin                                  # packed input row width
    M = W * Cout                                 # packed output row width
    Lp = -(-L // _LANE) * _LANE                  # lane-dense (multiple of 128)
    Mp = -(-M // _LANE) * _LANE
    in_itemsize = jnp.dtype(mxu_dtype).itemsize

    w_bytes = 3 * Lp * Mp * in_itemsize
    if 2 * w_bytes > 8 * 1024 * 1024:            # 4 MiB weight cap (v5e-safe, x2 buffers)
        # TODO(synk): blocked NHWC im2col path for large W / large channel counts.
        raise ValueError(
            f"width-Toeplitz weight would be {w_bytes} bytes (x2 buffered); "
            "this formulation targets the small-W / small-channel regime."
        )

    # Lane-packed rows (channels fastest), zero-padded: 1 row top+bottom for
    # the H halo (padding=1) and Lp-L zero lanes for lane density.
    x_rows = jnp.transpose(x_nchw, (0, 2, 3, 1)).reshape(N, H, L)
    x_pad = jnp.pad(x_rows, ((0, 0), (1, 1), (0, Lp - L))).astype(mxu_dtype)   # (N, H+2, Lp)

    # Fused Toeplitz weight: (3, L, M) -> zero-pad -> (3*Lp, Mp), rows ordered
    # to match the [dy0 | dy1 | dy2] lane concat in the kernel.
    w_toep = _build_toeplitz_weight(weight.astype(jnp.float32), W)
    w_fused = jnp.pad(w_toep, ((0, 0), (0, Lp - L), (0, Mp - M)))
    w_fused = w_fused.reshape(3 * Lp, Mp).astype(mxu_dtype)

    b_row = jnp.pad(jnp.tile(bias.astype(jnp.float32), W), (0, Mp - M)).reshape(1, Mp)

    nB = batch_block if batch_block is not None else _choose_batch_block(
        N, H, Lp, Mp, w_bytes, in_itemsize)
    if N % nB != 0:
        raise ValueError(f"batch_block={nB} must divide N={N}")
    grid = (N // nB,)

    kernel = functools.partial(_inconv_kernel, without_activation=without_activation)

    y_rows = pl.pallas_call(
        kernel,
        out_shape=jax.ShapeDtypeStruct((N, H, Mp), jnp.float32),
        grid=grid,
        in_specs=[
            pl.BlockSpec((nB, H + 2, Lp), lambda g: (g, 0, 0)),   # activation slab
            pl.BlockSpec((3 * Lp, Mp), lambda g: (0, 0)),         # resident weight
            pl.BlockSpec((1, Mp), lambda g: (0, 0)),              # resident bias
        ],
        out_specs=pl.BlockSpec((nB, H, Mp), lambda g: (g, 0, 0)),
        compiler_params=pltpu.CompilerParams(
            dimension_semantics=("parallel",),
        ),
    )(x_pad, w_fused, b_row)

    y = y_rows[:, :, :M].reshape(N, H, W, Cout)
    return jnp.transpose(y, (0, 3, 1, 2)).astype(x_nchw.dtype)


def _reference(x_nchw, weight, bias, *, without_activation=False):
    y = lax.conv_general_dilated(
        x_nchw, weight,
        window_strides=(1, 1),
        padding=((1, 1), (1, 1)),
        dimension_numbers=("NCHW", "OIHW", "NCHW"),
    )
    y = y + bias.reshape(1, -1, 1, 1)
    if not without_activation:
        y = jax.nn.sigmoid(y)
    return y


if __name__ == "__main__":
    # Small deterministic example: InConv(in_channels=4, out_channels=8)
    N, Cin, Cout, H, W = 2, 4, 8, 16, 16

    key = jax.random.PRNGKey(0)
    kx, kw, kb = jax.random.split(key, 3)
    x = jax.random.normal(kx, (N, Cin, H, W), jnp.float32)
    weight = 0.1 * jax.random.normal(kw, (Cout, Cin, 3, 3), jnp.float32)
    bias = 0.1 * jax.random.normal(kb, (Cout,), jnp.float32)

    # References: one on the same bf16-rounded inputs the kernel feeds the MXU
    # (tight tolerance), one on pure f32 inputs (loose, bf16-level tolerance).
    x_r = x.astype(jnp.bfloat16).astype(jnp.float32)
    w_r = weight.astype(jnp.bfloat16).astype(jnp.float32)

    for wo_act in (False, True):
        y = jax.block_until_ready(
            inconv_forward(x, weight, bias, without_activation=wo_act))
        assert y.shape == (N, Cout, H, W) and y.dtype == x.dtype
        y_ref_rounded = _reference(x_r, w_r, bias, without_activation=wo_act)
        y_ref_f32 = _reference(x, weight, bias, without_activation=wo_act)
        assert jnp.allclose(y, y_ref_rounded, atol=1e-4, rtol=1e-4), (
            f"mismatch vs bf16-rounded reference (without_activation={wo_act})")
        assert jnp.allclose(y, y_ref_f32, atol=5e-2, rtol=0), (
            f"mismatch vs f32 reference (without_activation={wo_act})")

    print("KERNEL_OK")
</pallas_src>

<mosaic_0001>
module attributes {stable_mosaic.version = 11 : i64} {
  func.func @_inconv_kernel(%arg0: i32, %arg1: memref<1x18x128xbf16, #tpu.memory_space<vmem>>, %arg2: memref<384x128xbf16, #tpu.memory_space<vmem>>, %arg3: memref<1x128xf32, #tpu.memory_space<vmem>>, %arg4: memref<1x16x128xf32, #tpu.memory_space<vmem>>) attributes {dimension_semantics = [#tpu.dimension_semantics<parallel>], iteration_bounds = array<i64: 2>, scalar_prefetch = 0 : i64, scratch_operands = 0 : i64, tpu.core_type = #tpu.core_type<tc>, window_params = [{transform_indices = @transform_0, window_bounds = array<i64: 1, 18, 128>}, {pipeline_mode = #tpu.pipeline_mode<synchronous>, transform_indices = @transform_1, window_bounds = array<i64: 384, 128>}, {pipeline_mode = #tpu.pipeline_mode<synchronous>, transform_indices = @transform_2, window_bounds = array<i64: 1, 128>}, {transform_indices = @transform_3, window_bounds = array<i64: 1, 16, 128>}]} {
    %c0 = arith.constant 0 : index
    %c0_0 = arith.constant 0 : index
    %0 = vector.load %arg2[%c0, %c0_0] : memref<384x128xbf16, #tpu.memory_space<vmem>>, vector<384x128xbf16>
    %c0_1 = arith.constant 0 : index
    %c0_2 = arith.constant 0 : index
    %1 = vector.load %arg3[%c0_1, %c0_2] : memref<1x128xf32, #tpu.memory_space<vmem>>, vector<1x128xf32>
    %c0_3 = arith.constant 0 : index
    %c0_4 = arith.constant 0 : index
    %c0_5 = arith.constant 0 : index
    %2 = vector.load %arg1[%c0_3, %c0_4, %c0_5] : memref<1x18x128xbf16, #tpu.memory_space<vmem>>, vector<1x18x128xbf16>
    %3 = vector.shape_cast %2 : vector<1x18x128xbf16> to vector<18x128xbf16>
    %4 = vector.extract_strided_slice %3 {offsets = [0, 0], sizes = [16, 128], strides = [1, 1]} : vector<18x128xbf16> to vector<16x128xbf16>
    %5 = vector.extract_strided_slice %3 {offsets = [1, 0], sizes = [16, 128], strides = [1, 1]} : vector<18x128xbf16> to vector<16x128xbf16>
    %6 = vector.extract_strided_slice %3 {offsets = [2, 0], sizes = [16, 128], strides = [1, 1]} : vector<18x128xbf16> to vector<16x128xbf16>
    %7 = tpu.concatenate %4, %5, %6 in 1 : vector<16x128xbf16>, vector<16x128xbf16>, vector<16x128xbf16> -> vector<16x384xbf16>
    %cst = arith.constant dense<0.000000e+00> : vector<16x128xf32>
    %8 = tpu.matmul %7, %0, %cst {dimension_numbers = #tpu.dot_dimension_numbers<[1], [0], [0], [1], [0, 0, 1, 1], [], []>} : vector<16x384xbf16>, vector<384x128xbf16>, vector<16x128xf32> -> vector<16x128xf32>
    %9 = vector.broadcast %1 : vector<1x128xf32> to vector<16x128xf32>
    %10 = arith.addf %8, %9 : vector<16x128xf32>
    %11 = arith.negf %10 : vector<16x128xf32>
    %12 = math.exp %11 : vector<16x128xf32>
    %cst_6 = arith.constant 1.000000e+00 : f32
    %13 = vector.broadcast %cst_6 : f32 to vector<16x128xf32>
    %14 = arith.addf %13, %12 : vector<16x128xf32>
    %15 = arith.divf %13, %14 : vector<16x128xf32>
    %c0_7 = arith.constant 0 : index
    %c0_8 = arith.constant 0 : index
    %c0_9 = arith.constant 0 : index
    %16 = vector.load %arg4[%c0_7, %c0_8, %c0_9] : memref<1x16x128xf32, #tpu.memory_space<vmem>>, vector<1x16x128xf32>
    %17 = vector.shape_cast %16 : vector<1x16x128xf32> to vector<16x128xf32>
    %18 = vector.shape_cast %15 : vector<16x128xf32> to vector<1x16x128xf32>
    tpu.vector_store %arg4[%c0_7, %c0_8, %c0_9], %18 {strides = array<i32>} : memref<1x16x128xf32, #tpu.memory_space<vmem>>, vector<1x16x128xf32>,
    return
  }
  func.func @transform_0(%arg0: i32) -> (i32, i32, i32) {
    %c0_i32 = arith.constant 0 : i32
    %c0_i32_0 = arith.constant 0 : i32
    %c0_i32_1 = arith.constant 0 : i32
    return %arg0, %c0_i32, %c0_i32_0 : i32, i32, i32
  }
  func.func @transform_1(%arg0: i32) -> (i32, i32) {
    %c0_i32 = arith.constant 0 : i32
    %c0_i32_0 = arith.constant 0 : i32
    %c0_i32_1 = arith.constant 0 : i32
    return %c0_i32, %c0_i32_0 : i32, i32
  }
  func.func @transform_2(%arg0: i32) -> (i32, i32) {
    %c0_i32 = arith.constant 0 : i32
    %c0_i32_0 = arith.constant 0 : i32
    %c0_i32_1 = arith.constant 0 : i32
    return %c0_i32, %c0_i32_0 : i32, i32
  }
  func.func @transform_3(%arg0: i32) -> (i32, i32, i32) {
    %c0_i32 = arith.constant 0 : i32
    %c0_i32_0 = arith.constant 0 : i32
    %c0_i32_1 = arith.constant 0 : i32
    return %arg0, %c0_i32, %c0_i32_0 : i32, i32, i32
  }
}

</mosaic_0001>

<llo_original>
// kernel: tpu_custom_call.1
$region0: #{tpu_custom_call.1}
  #allocation0 [shape = 'u32[]', space=smem, size = 0x4, offset = 0x4, fixed_abs, tag = 'smem constant byte address 0x4 - core index']
  #allocation1 [shape = 'u32[72,128]{1,0:T(1,128)}', space=vmem, size = 0x9000, scoped, tag = 'internal scratch']
  %s0 = inlined_call_operand.vmem [shape: bf16[2,18,128], index: 0, kind: input, shape index: {}]
  %s1 = inlined_call_operand.hbm [shape: bf16[384,128], index: 1, kind: input, shape index: {}]
  %s2 = inlined_call_operand.vmem [shape: f32[1,128], index: 2, kind: input, shape index: {}]
  %s3 = inlined_call_operand.hbm [shape: f32[2,16,128], index: 3, kind: output, shape index: {}]
  %s4 = sld [smem:[#allocation0]]
  $region49: #{tpu_custom_call.1} parent=0
    _
  %s6 = ssub.s32 1, %s4
  %s7 = scalar_select 0, %s6, %s4
  $region1: #{tpu_custom_call.1} parent=0
    #allocation2 [shape = 'u8[98304]{0}', space=vmem, size = 0x18000, scoped, tag = 'input window, operand 1, single buffered']
    #allocation3 [shape = 's32[2]{0}', space=sflag, size = 0x8, scoped, tag = 'scoped memory for tpu_custom_call.1']
    #allocation4 [shape = 's32[2]{0}', space=sflag, size = 0x8, scoped, tag = 'scoped memory for tpu_custom_call.1']
    #allocation5 [shape = 'u8[16384]{0}', space=vmem, size = 0x4000, scoped, tag = 'output window, operand 0']
    %8 = vsyncpa [#allocation3], 0
    %9 = vsyncpa [#allocation4], 0
    %s10 = scalar_lea.sflag [#allocation4], 1
    %11 = vsyncpa %s10, 0
    loop: start=0, step=1, limit=4
    $region2: #{tpu_custom_call.1} parent=1 // loop_pre_header
      _
    $region3: #{tpu_custom_call.1} parent=1 // loop_header
      %s13 = sphi 0, %s17
      %p14 = scmp.ge.s32.totalorder %s13, 4
      %s23 = sphi 0, %s25
      %s26 = sphi 0, %s23
      %s27 = sphi 0, %s26
      %s43 = sphi 0, %s27
      %s47 = sphi 0, %s47
      %s49 = sphi 0, %s47
      %s50 = sphi 0, %s49
      %s64 = sphi 0, %s50
      %s68 = sphi 0, %s68
      %s70 = sphi 0, %s68
      %s71 = sphi 0, %s70
      %s85 = sphi 0, %s71
      %s91 = sphi 0, %s93
      %s94 = sphi 0, %s91
      %s95 = sphi 0, %s94
      %s111 = sphi 0, %s95
    $region4: #{tpu_custom_call.1} parent=1 // loop_header_branch
      %16 = sbr.rel (%p14) target = $region8
    $region5: #{tpu_custom_call.1} parent=1 // loop_body
      %s18 = ssub.s32 %s13, 1
      %s19 = ssub.s32 %s13, 2
      %s20 = sadd.s32 %s13, 1
      %s21 = ssub.s32 %s13, %s20
      %p22 = scmp.eq.s32.totalorder %s21, 0
      %s24 = sadd.s32 %s23, 1
      %s25 = scalar_select %p22, %s23, %s24
      %p28 = pneg %p22
      %p29 = scmp.eq.s32.totalorder %s13, 1
      %p30 = por %p28, %p29
      %p31 = scmp.ne.s32.totalorder %s23, %s26
      %p32 = scmp.eq.s32.totalorder %s13, 0
      %p33 = por %p31, %p32
      %p34 = scmp.ne.s32.totalorder %s23, %s26
      %p35 = scmp.eq.s32.totalorder %s18, 1
      %p36 = por %p34, %p35
      %p37 = scmp.ne.s32.totalorder %s26, %s27
      %p38 = scmp.eq.s32.totalorder %s18, 0
      %p39 = por %p37, %p38
      %p40 = scmp.ne.s32.totalorder %s26, %s27
      %p41 = scmp.eq.s32.totalorder %s19, 1
      %p42 = por %p40, %p41
      %p44 = scmp.ne.s32.totalorder %s27, %s43
      %p45 = scmp.eq.s32.totalorder %s19, 0
      %p46 = por %p44, %p45
      %s48 = sadd.s32 %s47, 1
      %p51 = scmp.eq.s32.totalorder %s13, 1
      %p52 = scmp.ne.s32.totalorder %s47, %s49
      %p53 = scmp.eq.s32.totalorder %s13, 0
      %p54 = por %p52, %p53
      %p55 = scmp.ne.s32.totalorder %s47, %s49
      %p56 = scmp.eq.s32.totalorder %s18, 1
      %p57 = por %p55, %p56
      %p58 = scmp.ne.s32.totalorder %s49, %s50
      %p59 = scmp.eq.s32.totalorder %s18, 0
      %p60 = por %p58, %p59
      %p61 = scmp.ne.s32.totalorder %s49, %s50
      %p62 = scmp.eq.s32.totalorder %s19, 1
      %p63 = por %p61, %p62
      %p65 = scmp.ne.s32.totalorder %s50, %s64
      %p66 = scmp.eq.s32.totalorder %s19, 0
      %p67 = por %p65, %p66
      %s69 = sadd.s32 %s68, 1
      %p72 = scmp.eq.s32.totalorder %s13, 1
      %p73 = scmp.ne.s32.totalorder %s68, %s70
      %p74 = scmp.eq.s32.totalorder %s13, 0
      %p75 = por %p73, %p74
      %p76 = scmp.ne.s32.totalorder %s68, %s70
      %p77 = scmp.eq.s32.totalorder %s18, 1
      %p78 = por %p76, %p77
      %p79 = scmp.ne.s32.totalorder %s70, %s71
      %p80 = scmp.eq.s32.totalorder %s18, 0
      %p81 = por %p79, %p80
      %p82 = scmp.ne.s32.totalorder %s70, %s71
      %p83 = scmp.eq.s32.totalorder %s19, 1
      %p84 = por %p82, %p83
      %p86 = scmp.ne.s32.totalorder %s71, %s85
      %p87 = scmp.eq.s32.totalorder %s19, 0
      %p88 = por %p86, %p87
      %s89 = ssub.s32 %s13, %s20
      %p90 = scmp.eq.s32.totalorder %s89, 0
      %s92 = sadd.s32 %s91, 1
      %s93 = scalar_select %p90, %s91, %s92
      %p96 = pneg %p90
      %p97 = scmp.eq.s32.totalorder %s13, 1
      %p98 = por %p96, %p97
      %p99 = scmp.ne.s32.totalorder %s91, %s94
      %p100 = scmp.eq.s32.totalorder %s13, 0
      %p101 = por %p99, %p100
      %p102 = scmp.ne.s32.totalorder %s91, %s94
      %p103 = scmp.eq.s32.totalorder %s18, 1
      %p104 = por %p102, %p103
      %p105 = scmp.ne.s32.totalorder %s94, %s95
      %p106 = scmp.eq.s32.totalorder %s18, 0
      %p107 = por %p105, %p106
      %p108 = scmp.ne.s32.totalorder %s94, %s95
      %p109 = scmp.eq.s32.totalorder %s19, 1
      %p110 = por %p108, %p109
      %p112 = scmp.ne.s32.totalorder %s95, %s111
      %p113 = scmp.eq.s32.totalorder %s19, 0
      %p114 = por %p112, %p113
      %p115 = scmp.le.s32.totalorder 1, %s13
      %p116 = scmp.lt.s32.totalorder %s13, 3
      %p117 = pnand %p115, %p116
      %p118 = pneg %p117
      // Predicated region
      $region9: #{tpu_custom_call.1} parent=5 // pred_check
        _
      $region10: #{tpu_custom_call.1} parent=5 // pred_check_branch
        %120 = sbr.rel (%p117) target = $region12
      $region11: #{tpu_custom_call.1} parent=5 // pred_region
        %s121 = ssub.s32 %s13, 1
        // Predicated region
        $region13: #{tpu_custom_call.1} parent=11 // pred_check
          %p122 = pneg %p60
        $region14: #{tpu_custom_call.1} parent=11 // pred_check_branch
          %124 = sbr.rel (%p122) target = $region16
        $region15: #{tpu_custom_call.1} parent=11 // pred_region
          %126 = vsyncadd [#allocation3], 0
          %s127 = sshll.u32 %s1, 4
          %s128 = int_to_ptr.hbm [resolvable:$true] %s127
          %s129 = sshll.u32 [#allocation2], 4
          %s130 = int_to_ptr.vmem [resolvable:$true] %s129
          %135 = dma.hbm_to_vmem [thread:$0]  %s128, 3072, %s130, [#allocation3], 64, 64, 4
        $region16: #{tpu_custom_call.1} parent=11 // pred_fallthru
          _
        // Predicated region
        $region17: #{tpu_custom_call.1} parent=11 // pred_check
          %p136 = pneg %p81
        $region18: #{tpu_custom_call.1} parent=11 // pred_check_branch
          %138 = sbr.rel (%p136) target = $region20
        $region19: #{tpu_custom_call.1} parent=11 // pred_region
          _
        $region20: #{tpu_custom_call.1} parent=11 // pred_fallthru
          _
      $region12: #{tpu_custom_call.1} parent=5 // pred_fallthru
        _
      %p139 = scmp.lt.s32.totalorder %s13, 2
      // Predicated region
      $region21: #{tpu_custom_call.1} parent=5 // pred_check
        %p140 = pneg %p139
      $region22: #{tpu_custom_call.1} parent=5 // pred_check_branch
        %142 = sbr.rel (%p140) target = $region24
      $region23: #{tpu_custom_call.1} parent=5 // pred_region
        // Predicated region
        $region25: #{tpu_custom_call.1} parent=23 // pred_check
          %p143 = pneg %p33
        $region26: #{tpu_custom_call.1} parent=23 // pred_check_branch
          %145 = sbr.rel (%p143) target = $region28
        $region27: #{tpu_custom_call.1} parent=23 // pred_region
          %p146 = scmp.lt.s32.totalorder %s13, 1
          %s147 = scalar_select %p146, %s13, 1
          %s148 = smul.addr %s147, 3
          %s149 = smul.addr %s148, 4
          %s150 = scalar_lea.vmem %s0, %s149
        $region28: #{tpu_custom_call.1} parent=23 // pred_fallthru
          _
      $region24: #{tpu_custom_call.1} parent=5 // pred_fallthru
        _
      %p151 = scmp.le.s32.totalorder 1, %s13
      %p152 = scmp.lt.s32.totalorder %s13, 3
      %p153 = pnand %p151, %p152
      %p154 = pneg %p153
      // Predicated region
      $region29: #{tpu_custom_call.1} parent=5 // pred_check
        _
      $region30: #{tpu_custom_call.1} parent=5 // pred_check_branch
        %156 = sbr.rel (%p153) target = $region32
      $region31: #{tpu_custom_call.1} parent=5 // pred_region
        %s157 = ssub.s32 %s13, 1
        // Predicated region
        $region33: #{tpu_custom_call.1} parent=31 // pred_check
          %p158 = pneg %p60
        $region34: #{tpu_custom_call.1} parent=31 // pred_check_branch
          %160 = sbr.rel (%p158) target = $region36
        $region35: #{tpu_custom_call.1} parent=31 // pred_region
          %162 = dma.done [#allocation3], 3072
        $region36: #{tpu_custom_call.1} parent=31 // pred_fallthru
          _
        %p163 = scmp.lt.s32.totalorder %s18, 1
        %s164 = scalar_select %p163, %s18, 1
        %s165 = smul.addr %s164, 3
        %s166 = smul.addr %s165, 4
        %s167 = scalar_lea.vmem %s0, %s166
        %p168 = pneg %p39
        %p169 = pneg %p36
        %p170 = pneg %p60
        %p171 = pneg %p57
        %p172 = pneg %p81
        %p173 = pneg %p78
        %p174 = pneg %p107
        %p175 = pneg %p104
        %s176 = sand.u32 %s94, 1
        %s177 = scalar_lea.sflag [#allocation4], %s176
        %s178 = sand.u32 %s94, 1
        %s179 = smul.addr %s178, 16
        %s180 = scalar_lea.vmem [#allocation5], %s179
        %p181 = scmp.lt.s32.totalorder %s18, 1
        %s182 = scalar_select %p181, %s18, 1
        %s183 = smul.addr %s182, 3
        %s184 = smul.addr %s183, 4
        %s185 = scalar_lea.vmem %s0, %s184
        %v186 = vld [vmem:[#allocation2] sm:$0xf]
        %v187 = vld [vmem:[#allocation2 + $0x4] sm:$0xf]
        %v188 = vld [vmem:[#allocation2 + $0x8] sm:$0xf]
        %v189 = vld [vmem:[#allocation2 + $0xc] sm:$0xf]
        %v190 = vld [vmem:[#allocation2 + $0x10] sm:$0xf]
        %v191 = vld [vmem:[#allocation2 + $0x14] sm:$0xf]
        %v192 = vld [vmem:[#allocation2 + $0x18] sm:$0xf]
        %v193 = vld [vmem:[#allocation2 + $0x1c] sm:$0xf]
        %v194 = vld [vmem:[#allocation2 + $0x20] sm:$0xf]
        %v195 = vld [vmem:[#allocation2 + $0x24] sm:$0xf]
        %v196 = vld [vmem:[#allocation2 + $0x28] sm:$0xf]
        %v197 = vld [vmem:[#allocation2 + $0x2c] sm:$0xf]
        %v198 = vld [vmem:[#allocation2 + $0x30] sm:$0xf]
        %v199 = vld [vmem:[#allocation2 + $0x34] sm:$0xf]
        %v200 = vld [vmem:[#allocation2 + $0x38] sm:$0xf]
        %v201 = vld [vmem:[#allocation2 + $0x3c] sm:$0xf]
        %v202 = vld [vmem:[#allocation2 + $0x40] sm:$0xf]
        %v203 = vld [vmem:[#allocation2 + $0x44] sm:$0xf]
        %v204 = vld [vmem:[#allocation2 + $0x48] sm:$0xf]
        %v205 = vld [vmem:[#allocation2 + $0x4c] sm:$0xf]
        %v206 = vld [vmem:[#allocation2 + $0x50] sm:$0xf]
        %v207 = vld [vmem:[#allocation2 + $0x54] sm:$0xf]
        %v208 = vld [vmem:[#allocation2 + $0x58] sm:$0xf]
        %v209 = vld [vmem:[#allocation2 + $0x5c] sm:$0xf]
        %v210 = vld [vmem:[#allocation2 + $0x60] sm:$0xf]
        %v211 = vld [vmem:[#allocation2 + $0x64] sm:$0xf]
        %v212 = vld [vmem:[#allocation2 + $0x68] sm:$0xf]
        %v213 = vld [vmem:[#allocation2 + $0x6c] sm:$0xf]
        %v214 = vld [vmem:[#allocation2 + $0x70] sm:$0xf]
        %v215 = vld [vmem:[#allocation2 + $0x74] sm:$0xf]
        %v216 = vld [vmem:[#allocation2 + $0x78] sm:$0xf]
        %v217 = vld [vmem:[#allocation2 + $0x7c] sm:$0xf]
        %v218 = vld [vmem:[#allocation2 + $0x80] sm:$0xf]
        %v219 = vld [vmem:[#allocation2 + $0x84] sm:$0xf]
        %v220 = vld [vmem:[#allocation2 + $0x88] sm:$0xf]
        %v221 = vld [vmem:[#allocation2 + $0x8c] sm:$0xf]
        %v222 = vld [vmem:[#allocation2 + $0x90] sm:$0xf]
        %v223 = vld [vmem:[#allocation2 + $0x94] sm:$0xf]
        %v224 = vld [vmem:[#allocation2 + $0x98] sm:$0xf]
        %v225 = vld [vmem:[#allocation2 + $0x9c] sm:$0xf]
        %v226 = vld [vmem:[#allocation2 + $0xa0] sm:$0xf]
        %v227 = vld [vmem:[#allocation2 + $0xa4] sm:$0xf]
        %v228 = vld [vmem:[#allocation2 + $0xa8] sm:$0xf]
        %v229 = vld [vmem:[#allocation2 + $0xac] sm:$0xf]
        %v230 = vld [vmem:[#allocation2 + $0xb0] sm:$0xf]
        %v231 = vld [vmem:[#allocation2 + $0xb4] sm:$0xf]
        %v232 = vld [vmem:[#allocation2 + $0xb8] sm:$0xf]
        %v233 = vld [vmem:[#allocation2 + $0xbc] sm:$0xf]
        %v234 = vld [vmem:[%s2] sm:$0x1]
        %v235 = vld [vmem:[%s185] sm:$0xf]
        %v236 = vld [vmem:[%s185 + $0x4] sm:$0xf]
        %v237 = vld [vmem:[%s185 + $0x8] sm:$0x1]
        %v240 = vunpack.c.l.b16 %v235
        %v241 = vunpack.c.l.b16 %v236
        %v242 = vpack.c.b16 %v241, %v240
        %v245 = vunpack.c.l.b16 %v237
        %v246 = vpack.c.b16 %v245, %v245
        %vm247 = vsmask.f32 7424
        %v249 = vshrl.u32 %v242, 16
        %v251 = vshll.u32 %v242, 16
        %v253 = vrot.slane %v251, 1
        %v254 = vor.u32 %v249, %v253
        %v256 = vshll.u32 %v246, 16
        %v258 = vrot.slane %v256, 1
        %v259 = vsel %vm247, %v254, %v258
        %vm261 = vcmask 1046528
        %v262 = vrot.slane %v242, 1
        %v263 = vrot.slane %v246, 1
        %v264 = vsel %vm261, %v262, %v263
        %v267 = vperm.slane %v234, 0
        %v317 = vunpack.c.l.b16 %v186
        %v318 = vunpack.c.l.b16 %v187
        %v319 = vunpack.c.l.b16 %v188
        %v320 = vunpack.c.l.b16 %v189
        %v321 = vunpack.c.l.b16 %v190
        %v322 = vunpack.c.l.b16 %v191
        %v323 = vunpack.c.l.b16 %v192
        %v324 = vunpack.c.l.b16 %v193
        %v325 = vunpack.c.l.b16 %v194
        %v326 = vunpack.c.l.b16 %v195
        %v327 = vunpack.c.l.b16 %v196
        %v328 = vunpack.c.l.b16 %v197
        %v329 = vunpack.c.l.b16 %v198
        %v330 = vunpack.c.l.b16 %v199
        %v331 = vunpack.c.l.b16 %v200
        %v332 = vunpack.c.l.b16 %v201
        %v333 = vunpack.c.l.b16 %v202
        %v334 = vunpack.c.l.b16 %v203
        %v335 = vunpack.c.l.b16 %v204
        %v336 = vunpack.c.l.b16 %v205
        %v337 = vunpack.c.l.b16 %v206
        %v338 = vunpack.c.l.b16 %v207
        %v339 = vunpack.c.l.b16 %v208
        %v340 = vunpack.c.l.b16 %v209
        %v341 = vunpack.c.l.b16 %v210
        %v342 = vunpack.c.l.b16 %v211
        %v343 = vunpack.c.l.b16 %v212
        %v344 = vunpack.c.l.b16 %v213
        %v345 = vunpack.c.l.b16 %v214
        %v346 = vunpack.c.l.b16 %v215
        %v347 = vunpack.c.l.b16 %v216
        %v348 = vunpack.c.l.b16 %v217
        %v349 = vunpack.c.l.b16 %v218
        %v350 = vunpack.c.l.b16 %v219
        %v351 = vunpack.c.l.b16 %v220
        %v352 = vunpack.c.l.b16 %v221
        %v353 = vunpack.c.l.b16 %v222
        %v354 = vunpack.c.l.b16 %v223
        %v355 = vunpack.c.l.b16 %v224
        %v356 = vunpack.c.l.b16 %v225
        %v357 = vunpack.c.l.b16 %v226
        %v358 = vunpack.c.l.b16 %v227
        %v359 = vunpack.c.l.b16 %v228
        %v360 = vunpack.c.l.b16 %v229
        %v361 = vunpack.c.l.b16 %v230
        %v362 = vunpack.c.l.b16 %v231
        %v363 = vunpack.c.l.b16 %v232
        %v364 = vunpack.c.l.b16 %v233
        %v365 = vpack.c.b16 %v318, %v317
        %v366 = vpack.c.b16 %v320, %v319
        %v367 = vpack.c.b16 %v322, %v321
        %v368 = vpack.c.b16 %v324, %v323
        %v369 = vpack.c.b16 %v326, %v325
        %v370 = vpack.c.b16 %v328, %v327
        %v371 = vpack.c.b16 %v330, %v329
        %v372 = vpack.c.b16 %v332, %v331
        %v373 = vpack.c.b16 %v334, %v333
        %v374 = vpack.c.b16 %v336, %v335
        %v375 = vpack.c.b16 %v338, %v337
        %v376 = vpack.c.b16 %v340, %v339
        %v377 = vpack.c.b16 %v342, %v341
        %v378 = vpack.c.b16 %v344, %v343
        %v379 = vpack.c.b16 %v346, %v345
        %v380 = vpack.c.b16 %v348, %v347
        %v381 = vpack.c.b16 %v350, %v349
        %v382 = vpack.c.b16 %v352, %v351
        %v383 = vpack.c.b16 %v354, %v353
        %v384 = vpack.c.b16 %v356, %v355
        %v385 = vpack.c.b16 %v358, %v357
        %v386 = vpack.c.b16 %v360, %v359
        %v387 = vpack.c.b16 %v362, %v361
        %v388 = vpack.c.b16 %v364, %v363
        %413 = vmatpush.bf16.msra.mxu0 %v372
        %414 = vmatpush.bf16.msra.mxu0 %v371
        %415 = vmatpush.bf16.msra.mxu0 %v370
        %416 = vmatpush.bf16.msra.mxu0 %v369
        %417 = vmatpush.bf16.msra.mxu0 %v368
        %418 = vmatpush.bf16.msra.mxu0 %v367
        %419 = vmatpush.bf16.msra.mxu0 %v366
        %420 = vmatpush.bf16.msra.mxu0 %v365
        %421 = vmatmul.bf16.gmra.mxu0 %v242
        %v422 = vpop.f32.mrf.mxu0
        %v423 = vadd.f32 %v267, %v422
        %v424 = vpop.f32.mrf.mxu0
        %v425 = vadd.f32 %v267, %v424
        %426 = vdwg.mxu0
        %427 = vmatpush.bf16.msra.mxu0 %v380
        %428 = vmatpush.bf16.msra.mxu0 %v379
        %429 = vmatpush.bf16.msra.mxu0 %v378
        %430 = vmatpush.bf16.msra.mxu0 %v377
        %431 = vmatpush.bf16.msra.mxu0 %v376
        %432 = vmatpush.bf16.msra.mxu0 %v375
        %433 = vmatpush.bf16.msra.mxu0 %v374
        %434 = vmatpush.bf16.msra.mxu0 %v373
        %435 = vmatmul.bf16.gmra.mxu0 %v259
        %v436 = vpop.f32.mrf.mxu0
        %v437 = vadd.f32 %v423, %v436
        %v438 = vpop.f32.mrf.mxu0
        %v439 = vadd.f32 %v425, %v438
        %440 = vdwg.mxu0
        %441 = vmatpush.bf16.msra.mxu0 %v388
        %442 = vmatpush.bf16.msra.mxu0 %v387
        %443 = vmatpush.bf16.msra.mxu0 %v386
        %444 = vmatpush.bf16.msra.mxu0 %v385
        %445 = vmatpush.bf16.msra.mxu0 %v384
        %446 = vmatpush.bf16.msra.mxu0 %v383
        %447 = vmatpush.bf16.msra.mxu0 %v382
        %448 = vmatpush.bf16.msra.mxu0 %v381
        %449 = vmatmul.bf16.gmra.mxu0 %v264
        %v450 = vpop.f32.mrf.mxu0
        %v451 = vadd.f32 %v437, %v450
        %v452 = vpop.f32.mrf.mxu0
        %v453 = vadd.f32 %v439, %v452
        %454 = vdwg.mxu0
        %v455 = vxor.u32 %v451, 2147483648
        %v456 = vxor.u32 %v453, 2147483648
        %v457 = vmul.f32 %v455, 1.442695
        %v458 = vpow.pop %v457
        %v459 = vmul.f32 %v456, 1.442695
        %v460 = vpow.pop %v459
        %v461 = vadd.f32 %v458, 1.0
        %v462 = vadd.f32 %v460, 1.0
        %v463 = vrcp.pop %v461
        %v464 = vmul.f32 %v461, %v463
        %v465 = vsub.f32 1.0, %v464
        %v466 = vmul.f32 %v463, %v465
        %v467 = vadd.f32 %v463, %v466
        %vm468 = vweird.f32 %v461
        %vm469 = vweird.f32 %v463
        %vm470 = vmor %vm468, %vm469
        %v471 = vsel %vm470, %v463, %v467
        %v472 = vand.u32 2147483647, %v461
        %vm473 = vcmp.eq.f32.partialorder %v472, 8.507059e+37
        %v474 = vand.u32 %v461, 2147483648
        %v475 = vor.u32 1.1754944e-38, %v474
        %v476 = vsel %vm473, %v475, %v471
        %v477 = vmul.f32 1.0, %v476
        %v478 = vrcp.pop %v462
        %v479 = vmul.f32 %v462, %v478
        %v480 = vsub.f32 1.0, %v479
        %v481 = vmul.f32 %v478, %v480
        %v482 = vadd.f32 %v478, %v481
        %vm483 = vweird.f32 %v462
        %vm484 = vweird.f32 %v478
        %vm485 = vmor %vm483, %vm484
        %v486 = vsel %vm485, %v478, %v482
        %v487 = vand.u32 2147483647, %v462
        %vm488 = vcmp.eq.f32.partialorder %v487, 8.507059e+37
        %v489 = vand.u32 %v462, 2147483648
        %v490 = vor.u32 1.1754944e-38, %v489
        %v491 = vsel %vm488, %v490, %v486
        %v492 = vmul.f32 1.0, %v491
        %493 = vst [vmem:[%s180] sm:$0xff] %v477
        %494 = vst [vmem:[%s180 + $0x8] sm:$0xff] %v492
        %s495 = sand.u32 %s94, 1
        %s496 = scalar_lea.sflag [#allocation4], %s495
        %s497 = sand.u32 %s94, 1
        %s498 = smul.addr %s497, 16
        %s499 = scalar_lea.vmem [#allocation5], %s498
        // Predicated region
        $region37: #{tpu_custom_call.1} parent=31 // pred_check
          %p500 = pneg %p104
        $region38: #{tpu_custom_call.1} parent=31 // pred_check_branch
          %502 = sbr.rel (%p500) target = $region40
        $region39: #{tpu_custom_call.1} parent=31 // pred_region
          %504 = vsyncadd %s496, 0
          %s505 = smul.addr %s18, 2
          %s506 = smul.addr %s505, 8
          %s507 = scalar_lea.hbm %s3, %s506
          %s508 = sshll.u32 %s499, 4
          %s509 = int_to_ptr.vmem [resolvable:$true] %s508
          %s510 = sshll.u32 %s507, 4
          %s511 = int_to_ptr.hbm [resolvable:$true] %s510
          %516 = dma.vmem_to_hbm [thread:$0]  %s509, 256, %s511, %s496, 128, 128, 8
        $region40: #{tpu_custom_call.1} parent=31 // pred_fallthru
          _
      $region32: #{tpu_custom_call.1} parent=5 // pred_fallthru
        _
      %p517 = scmp.le.s32.totalorder 2, %s13
      // Predicated region
      $region41: #{tpu_custom_call.1} parent=5 // pred_check
        %p518 = pneg %p517
      $region42: #{tpu_custom_call.1} parent=5 // pred_check_branch
        %520 = sbr.rel (%p518) target = $region44
      $region43: #{tpu_custom_call.1} parent=5 // pred_region
        %s521 = ssub.s32 %s13, 2
        // Predicated region
        $region45: #{tpu_custom_call.1} parent=43 // pred_check
          %p522 = pneg %p110
        $region46: #{tpu_custom_call.1} parent=43 // pred_check_branch
          %524 = sbr.rel (%p522) target = $region48
        $region47: #{tpu_custom_call.1} parent=43 // pred_region
          %s525 = sand.u32 %s95, 1
          %s526 = scalar_lea.sflag [#allocation4], %s525
          %s527 = sand.u32 %s95, 1
          %s528 = smul.addr %s527, 16
          %s529 = scalar_lea.vmem [#allocation5], %s528
          %531 = dma.done %s526, 256
        $region48: #{tpu_custom_call.1} parent=43 // pred_fallthru
          _
      $region44: #{tpu_custom_call.1} parent=5 // pred_fallthru
        _
    $region6: #{tpu_custom_call.1} parent=1 // loop_footer
      %s17 = sadd.s32 1, %s13
    $region7: #{tpu_custom_call.1} parent=1 // loop_footer_branch
      %12 = sbr.rel target = $region3
    $region8: #{tpu_custom_call.1} parent=1 // loop_exit
      _
    %532 = vsyncpa [#allocation3], 1
    %s533 = scalar_lea.sflag [#allocation3], 1
    %534 = vsyncpa %s533, 1
    %535 = vsyncpa [#allocation4], 1
    %s536 = scalar_lea.sflag [#allocation4], 1
    %537 = vsyncpa %s536, 1

</llo_original>
